<compile_context>
chip_gen: v5e
topology: v5e:2x2
jax: 0.10.0
libtpu: 0.0.40
codegen_flags: <defaults>
</compile_context>

<pallas_src>
import jax
import jax.numpy as jnp
from jax import lax
from jax.experimental import pallas as pl
from jax.experimental.pallas import tpu as pltpu

# Deterministic stand-ins for the dataset statistics used by CompositeLoss.
MEDIAN_ANGLE = 0.1   # circular_median(mid_angles)
MID_MEAN     = 5.0   # np.mean(mid_lens)
EPI_MEAN     = 4.0   # np.mean(epi_lens)
YMID_MEAN    = 0.5   # np.mean(ymid_centers)
XEPI_MEAN    = 0.3   # np.mean(xepi_ends)
YVTB_MEAN    = 0.6   # np.mean(yvtb_centers)

NUM_KP = 6
LANE   = 128
NACC   = 24          # accumulator rows (3 full sublane tiles)

# Accumulator row map (8-aligned groups):
#   rows  0..5  : per-keypoint sum(se * mask)
#   rows  8..13 : per-keypoint sum(mask)         (denominators)
#   rows 16..22 : ang_mid, ang_epi, len_mid, len_epi, cy_mid, ex_hng, vy_vtb
#   rows 6,7,14,15,23 : padding (always zero)


def composite_loss_kernel(pk_ref, out_ref, acc_ref):
    i = pl.program_id(1)

    @pl.when(i == 0)
    def _init():
        acc_ref[...] = jnp.zeros_like(acc_ref)

    pk = pk_ref[...].astype(jnp.float32)           # (24, tb) packed slab
    px = pk[0:6, :]
    py = pk[6:12, :]
    tx = pk[12:18, :]
    ty = pk[18:24, :]

    # Per-keypoint visibility mask and squared error, dense (6, tb) slabs.
    mask = ((jnp.abs(tx) + jnp.abs(ty)) > 0.0).astype(jnp.float32)   # (6, tb)
    se = (px - tx) ** 2 + (py - ty) ** 2                             # (6, tb)

    # Group-wise, sublane-aligned accumulation (no 24-row concat / no spills).
    acc_ref[0:6, :]  += jnp.sum(se * mask, axis=-1, keepdims=True)   # (6, 1)
    acc_ref[8:14, :] += jnp.sum(mask,      axis=-1, keepdims=True)   # (6, 1)

    mask0 = mask[0:1, :]
    mask1 = mask[1:2, :]
    mask2 = mask[2:3, :]

    # Batched transcendentals: one arctan2 / one sqrt over (2, tb)
    # instead of two (1, tb) EUP passes each.
    dx = jnp.concatenate([px[1:2, :] - px[0:1, :],
                          px[3:4, :] - px[2:3, :]], axis=0)          # (2, tb)
    dy = jnp.concatenate([py[1:2, :] - py[0:1, :],
                          py[3:4, :] - py[2:3, :]], axis=0)          # (2, tb)
    ang = jnp.arctan2(dy, dx)                                        # (2, tb)
    ln  = jnp.sqrt(dx * dx + dy * dy)                                # (2, tb)

    ang_mid = (ang[0:1, :] - MEDIAN_ANGLE) ** 2 * mask0
    ang_epi = (ang[1:2, :]) ** 2 * mask1
    len_mid = (ln[0:1, :] - MID_MEAN) ** 2 * mask0
    len_epi = (ln[1:2, :] - EPI_MEAN) ** 2 * mask1
    cy_mid  = ((py[0:1, :] + py[1:2, :]) * 0.5 - YMID_MEAN) ** 2 * mask0
    ex_hng  = jnp.maximum(XEPI_MEAN - px[3:4, :], 0.0) ** 2 * mask1
    vy_vtb  = ((py[4:5, :] + py[5:6, :]) * 0.5 - YVTB_MEAN) ** 2 * mask2

    tb = pk.shape[1]
    geo = jnp.concatenate(
        [ang_mid, ang_epi, len_mid, len_epi, cy_mid, ex_hng, vy_vtb,
         jnp.zeros((1, tb), jnp.float32)], axis=0)                   # (8, tb)
    acc_ref[16:24, :] += jnp.sum(geo, axis=-1, keepdims=True)        # (8, 1)

    @pl.when(i == pl.num_programs(1) - 1)
    def _finalize():
        # Lane-dense write of this split's partial sums (once per split).
        out_ref[...] = jnp.broadcast_to(acc_ref[...][None], (1, NACC, LANE))


def composite_loss(pred, tgt, log_vars, *, block_b=8192, n_split=None):
    """pred, tgt: (B, 12) float; log_vars: (6,) float. Returns scalar f32."""
    B = pred.shape[0]
    f32 = jnp.float32

    # Mem-bound kernel: keep bf16 inputs in bf16 on the HBM side, upcast in-kernel.
    if pred.dtype == jnp.bfloat16 and tgt.dtype == jnp.bfloat16:
        in_dt = jnp.bfloat16
    else:
        in_dt = f32

    # Optional 2-way batch split on a leading "parallel" axis (uses both TCs on
    # v7x at large B; runs sequentially and is negligible on v5e/v6e).
    if n_split is None:
        n_split = 2 if B >= 2 * block_b else 1

    per_split = pl.cdiv(B, n_split)
    tb = min(block_b, ((per_split + LANE - 1) // LANE) * LANE)   # lane-aligned tile
    nblk = pl.cdiv(per_split, tb)
    b_pad = n_split * nblk * tb

    # Single packed slab: rows [px(6); py(6); tx(6); ty(6)], batch on lanes,
    # zero-padded (padded lanes have mask == 0, so they contribute nothing).
    # TODO(synk): fuse this layout change into the producer of `pred`/`tgt`
    # (emit (12, B) slabs directly) to avoid one full HBM round-trip.
    p3 = pred.astype(in_dt).reshape(B, NUM_KP, 2)
    t3 = tgt.astype(in_dt).reshape(B, NUM_KP, 2)
    packed = jnp.concatenate(
        [p3[:, :, 0], p3[:, :, 1], t3[:, :, 0], t3[:, :, 1]], axis=1).T  # (24, B)
    packed = jnp.zeros((NACC, b_pad), in_dt).at[:, :B].set(packed)

    out = pl.pallas_call(
        composite_loss_kernel,
        out_shape=jax.ShapeDtypeStruct((n_split, NACC, LANE), f32),
        grid_spec=pltpu.PrefetchScalarGridSpec(
            num_scalar_prefetch=0,
            grid=(n_split, nblk),
            in_specs=[pl.BlockSpec((NACC, tb), lambda c, i: (0, c * nblk + i))],
            out_specs=pl.BlockSpec((1, NACC, LANE), lambda c, i: (c, 0, 0)),
            scratch_shapes=[pltpu.VMEM((NACC, 1), f32)],
        ),
        compiler_params=pltpu.CompilerParams(
            dimension_semantics=("parallel", "arbitrary")),
    )(packed)

    # Tiny scalar epilogue in plain XLA: combine per-split partials, hoisted
    # reciprocals, L0..L5, uncertainty weighting.
    s = out[:, :, 0].sum(axis=0)                         # (24,)
    inv_d  = 1.0 / jnp.maximum(jnp.sum(s[8:14]), 1.0)
    inv_m0 = 1.0 / jnp.maximum(s[8], 1.0)
    inv_m1 = 1.0 / jnp.maximum(s[9], 1.0)
    inv_m2 = 1.0 / jnp.maximum(s[10], 1.0)

    L0 = jnp.sum(s[0:6]) * inv_d
    L1 = s[16] * inv_m0 + s[17] * inv_m1
    L2 = s[18] * inv_m0 + s[19] * inv_m1
    L3 = s[20] * inv_m0
    L4 = s[21] * inv_m1
    L5 = s[22] * inv_m2

    losses = jnp.stack([L0, L1, L2, L3, L4, L5])
    lv = log_vars.astype(f32).reshape(NUM_KP)
    return jnp.sum(losses * jnp.exp(-lv) + lv)


def composite_loss_ref(pred, tgt, log_vars):
    """Pure-JAX reference mirroring the PyTorch forward."""
    B = pred.shape[0]
    p = pred.reshape(B, 6, 2)
    t = tgt.reshape(B, 6, 2)
    mask = (jnp.abs(t).sum(axis=2) > 0).astype(jnp.float32)
    se = ((pred - tgt) ** 2).reshape(B, 6, 2).sum(axis=2)
    denom = jnp.maximum(mask.sum(), 1.0)
    L0 = (se * mask).sum() / denom
    dxm = p[:, 1, 0] - p[:, 0, 0]
    dym = p[:, 1, 1] - p[:, 0, 1]
    Lmid = ((jnp.arctan2(dym, dxm) - MEDIAN_ANGLE) ** 2 * mask[:, 0]).sum() / jnp.maximum(mask[:, 0].sum(), 1.0)
    dxe = p[:, 3, 0] - p[:, 2, 0]
    dye = p[:, 3, 1] - p[:, 2, 1]
    Lepi = ((jnp.arctan2(dye, dxe) - 0.0) ** 2 * mask[:, 1]).sum() / jnp.maximum(mask[:, 1].sum(), 1.0)
    L1 = Lmid + Lepi
    lm = jnp.linalg.norm(p[:, 1] - p[:, 0], axis=1)
    le = jnp.linalg.norm(p[:, 3] - p[:, 2], axis=1)
    L2 = (((lm - MID_MEAN) ** 2 * mask[:, 0]).sum() / jnp.maximum(mask[:, 0].sum(), 1.0)
          + ((le - EPI_MEAN) ** 2 * mask[:, 1]).sum() / jnp.maximum(mask[:, 1].sum(), 1.0))
    cY = (p[:, 0, 1] + p[:, 1, 1]) * 0.5
    L3 = ((cY - YMID_MEAN) ** 2 * mask[:, 0]).sum() / jnp.maximum(mask[:, 0].sum(), 1.0)
    eX = p[:, 3, 0]
    L4 = (jnp.maximum(XEPI_MEAN - eX, 0.0) ** 2 * mask[:, 1]).sum() / jnp.maximum(mask[:, 1].sum(), 1.0)
    vY = (p[:, 4, 1] + p[:, 5, 1]) * 0.5
    L5 = ((vY - YVTB_MEAN) ** 2 * mask[:, 2]).sum() / jnp.maximum(mask[:, 2].sum(), 1.0)
    losses = jnp.stack([L0, L1, L2, L3, L4, L5])
    return jnp.sum(losses * jnp.exp(-log_vars) + log_vars)


if __name__ == "__main__":
    key = jax.random.PRNGKey(0)
    k1, k2 = jax.random.split(key)
    B = 8
    pred = jax.random.normal(k1, (B, 12), dtype=jnp.float32)
    tgt = jax.random.normal(k2, (B, 12), dtype=jnp.float32)
    # Zero out some target keypoints so masking / clamped denominators are exercised.
    tgt = tgt.at[:2, 4:6].set(0.0)   # keypoint 2 invisible in first two samples
    tgt = tgt.at[3, 0:2].set(0.0)    # keypoint 0 invisible in sample 3

    # Deterministic parameter init, matching nn.Parameter(torch.zeros(6)).
    log_vars = jnp.zeros((6,), jnp.float32)

    out = composite_loss(pred, tgt, log_vars)
    out = jax.block_until_ready(out)

    ref = composite_loss_ref(pred, tgt, log_vars)
    assert jnp.allclose(out, ref, rtol=1e-4, atol=1e-4), (out, ref)

    print("KERNEL_OK")
</pallas_src>

<mosaic_0001>
module attributes {stable_mosaic.version = 11 : i64} {
  func.func @composite_loss_kernel(%arg0: i32, %arg1: i32, %arg2: memref<24x128xf32, #tpu.memory_space<vmem>>, %arg3: memref<1x24x128xf32, #tpu.memory_space<vmem>>, %arg4: memref<24x1xf32, #tpu.memory_space<vmem>>) attributes {dimension_semantics = [#tpu.dimension_semantics<parallel>, #tpu.dimension_semantics<arbitrary>], iteration_bounds = array<i64: 1, 1>, scalar_prefetch = 0 : i64, scratch_operands = 1 : i64, tpu.core_type = #tpu.core_type<tc>, window_params = [{transform_indices = @transform_0, window_bounds = array<i64: 24, 128>}, {transform_indices = @transform_1, window_bounds = array<i64: 1, 24, 128>}]} {
    %c0_i32 = arith.constant 0 : i32
    %0 = arith.cmpi eq, %arg1, %c0_i32 : i32
    %1 = arith.extui %0 : i1 to i32
    %c0_i32_0 = arith.constant 0 : i32
    %2 = arith.cmpi ne, %1, %c0_i32_0 : i32
    scf.if %2 {
      %cst_27 = arith.constant 0.000000e+00 : f32
      %106 = vector.broadcast %cst_27 : f32 to vector<24x1xf32>
      %c0_28 = arith.constant 0 : index
      %c0_29 = arith.constant 0 : index
      %107 = vector.load %arg4[%c0_28, %c0_29] : memref<24x1xf32, #tpu.memory_space<vmem>>, vector<24x1xf32>
      tpu.vector_store %arg4[%c0_28, %c0_29], %106 {strides = array<i32>} : memref<24x1xf32, #tpu.memory_space<vmem>>, vector<24x1xf32>,
    } else {
    }
    %c0 = arith.constant 0 : index
    %c0_1 = arith.constant 0 : index
    %3 = vector.load %arg2[%c0, %c0_1] : memref<24x128xf32, #tpu.memory_space<vmem>>, vector<24x128xf32>
    %4 = vector.extract_strided_slice %3 {offsets = [0, 0], sizes = [6, 128], strides = [1, 1]} : vector<24x128xf32> to vector<6x128xf32>
    %5 = vector.extract_strided_slice %3 {offsets = [6, 0], sizes = [6, 128], strides = [1, 1]} : vector<24x128xf32> to vector<6x128xf32>
    %6 = vector.extract_strided_slice %3 {offsets = [12, 0], sizes = [6, 128], strides = [1, 1]} : vector<24x128xf32> to vector<6x128xf32>
    %7 = vector.extract_strided_slice %3 {offsets = [18, 0], sizes = [6, 128], strides = [1, 1]} : vector<24x128xf32> to vector<6x128xf32>
    %8 = math.absf %6 : vector<6x128xf32>
    %9 = math.absf %7 : vector<6x128xf32>
    %10 = arith.addf %8, %9 : vector<6x128xf32>
    %cst = arith.constant 0.000000e+00 : f32
    %11 = vector.broadcast %cst : f32 to vector<6x128xf32>
    %12 = arith.cmpf ogt, %10, %11 : vector<6x128xf32>
    %13 = arith.extui %12 : vector<6x128xi1> to vector<6x128xi32>
    %14 = arith.sitofp %13 : vector<6x128xi32> to vector<6x128xf32>
    %15 = arith.subf %4, %6 : vector<6x128xf32>
    %16 = arith.mulf %15, %15 : vector<6x128xf32>
    %17 = arith.subf %5, %7 : vector<6x128xf32>
    %18 = arith.mulf %17, %17 : vector<6x128xf32>
    %19 = arith.addf %16, %18 : vector<6x128xf32>
    %c0_2 = arith.constant 0 : index
    %c0_3 = arith.constant 0 : index
    %20 = vector.load %arg4[%c0_2, %c0_3] : memref<24x1xf32, #tpu.memory_space<vmem>>, vector<6x1xf32>
    %21 = arith.mulf %19, %14 : vector<6x128xf32>
    %cst_4 = arith.constant dense<0.000000e+00> : vector<6xf32>
    %22 = vector.multi_reduction <add>, %21, %cst_4 [1] : vector<6x128xf32> to vector<6xf32>
    %23 = vector.shape_cast %22 : vector<6xf32> to vector<6x1xf32>
    %24 = arith.addf %20, %23 : vector<6x1xf32>
    %c0_5 = arith.constant 0 : index
    %c0_6 = arith.constant 0 : index
    %25 = vector.load %arg4[%c0_5, %c0_6] : memref<24x1xf32, #tpu.memory_space<vmem>>, vector<6x1xf32>
    tpu.vector_store %arg4[%c0_5, %c0_6], %24 {strides = array<i32>} : memref<24x1xf32, #tpu.memory_space<vmem>>, vector<6x1xf32>,
    %c8 = arith.constant 8 : index
    %c0_7 = arith.constant 0 : index
    %26 = vector.load %arg4[%c8, %c0_7] : memref<24x1xf32, #tpu.memory_space<vmem>>, vector<6x1xf32>
    %cst_8 = arith.constant dense<0.000000e+00> : vector<6xf32>
    %27 = vector.multi_reduction <add>, %14, %cst_8 [1] : vector<6x128xf32> to vector<6xf32>
    %28 = vector.shape_cast %27 : vector<6xf32> to vector<6x1xf32>
    %29 = arith.addf %26, %28 : vector<6x1xf32>
    %c8_9 = arith.constant 8 : index
    %c0_10 = arith.constant 0 : index
    %30 = vector.load %arg4[%c8_9, %c0_10] : memref<24x1xf32, #tpu.memory_space<vmem>>, vector<6x1xf32>
    tpu.vector_store %arg4[%c8_9, %c0_10], %29 {strides = array<i32>} : memref<24x1xf32, #tpu.memory_space<vmem>>, vector<6x1xf32>,
    %31 = vector.extract_strided_slice %14 {offsets = [0, 0], sizes = [1, 128], strides = [1, 1]} : vector<6x128xf32> to vector<1x128xf32>
    %32 = vector.extract_strided_slice %14 {offsets = [1, 0], sizes = [1, 128], strides = [1, 1]} : vector<6x128xf32> to vector<1x128xf32>
    %33 = vector.extract_strided_slice %14 {offsets = [2, 0], sizes = [1, 128], strides = [1, 1]} : vector<6x128xf32> to vector<1x128xf32>
    %34 = vector.extract_strided_slice %4 {offsets = [1, 0], sizes = [1, 128], strides = [1, 1]} : vector<6x128xf32> to vector<1x128xf32>
    %35 = vector.extract_strided_slice %4 {offsets = [0, 0], sizes = [1, 128], strides = [1, 1]} : vector<6x128xf32> to vector<1x128xf32>
    %36 = arith.subf %34, %35 : vector<1x128xf32>
    %37 = vector.extract_strided_slice %4 {offsets = [3, 0], sizes = [1, 128], strides = [1, 1]} : vector<6x128xf32> to vector<1x128xf32>
    %38 = vector.extract_strided_slice %4 {offsets = [2, 0], sizes = [1, 128], strides = [1, 1]} : vector<6x128xf32> to vector<1x128xf32>
    %39 = arith.subf %37, %38 : vector<1x128xf32>
    %40 = tpu.concatenate %36, %39 in 0 : vector<1x128xf32>, vector<1x128xf32> -> vector<2x128xf32>
    %41 = vector.extract_strided_slice %5 {offsets = [1, 0], sizes = [1, 128], strides = [1, 1]} : vector<6x128xf32> to vector<1x128xf32>
    %42 = vector.extract_strided_slice %5 {offsets = [0, 0], sizes = [1, 128], strides = [1, 1]} : vector<6x128xf32> to vector<1x128xf32>
    %43 = arith.subf %41, %42 : vector<1x128xf32>
    %44 = vector.extract_strided_slice %5 {offsets = [3, 0], sizes = [1, 128], strides = [1, 1]} : vector<6x128xf32> to vector<1x128xf32>
    %45 = vector.extract_strided_slice %5 {offsets = [2, 0], sizes = [1, 128], strides = [1, 1]} : vector<6x128xf32> to vector<1x128xf32>
    %46 = arith.subf %44, %45 : vector<1x128xf32>
    %47 = tpu.concatenate %43, %46 in 0 : vector<1x128xf32>, vector<1x128xf32> -> vector<2x128xf32>
    %48 = math.atan2 %47, %40 : vector<2x128xf32>
    %49 = arith.mulf %40, %40 : vector<2x128xf32>
    %50 = arith.mulf %47, %47 : vector<2x128xf32>
    %51 = arith.addf %49, %50 : vector<2x128xf32>
    %52 = math.sqrt %51 : vector<2x128xf32>
    %53 = vector.extract_strided_slice %48 {offsets = [0, 0], sizes = [1, 128], strides = [1, 1]} : vector<2x128xf32> to vector<1x128xf32>
    %cst_11 = arith.constant 1.000000e-01 : f32
    %54 = vector.broadcast %cst_11 : f32 to vector<1x128xf32>
    %55 = arith.subf %53, %54 : vector<1x128xf32>
    %56 = arith.mulf %55, %55 : vector<1x128xf32>
    %57 = arith.mulf %56, %31 : vector<1x128xf32>
    %58 = vector.extract_strided_slice %48 {offsets = [1, 0], sizes = [1, 128], strides = [1, 1]} : vector<2x128xf32> to vector<1x128xf32>
    %59 = arith.mulf %58, %58 : vector<1x128xf32>
    %60 = arith.mulf %59, %32 : vector<1x128xf32>
    %61 = vector.extract_strided_slice %52 {offsets = [0, 0], sizes = [1, 128], strides = [1, 1]} : vector<2x128xf32> to vector<1x128xf32>
    %cst_12 = arith.constant 5.000000e+00 : f32
    %62 = vector.broadcast %cst_12 : f32 to vector<1x128xf32>
    %63 = arith.subf %61, %62 : vector<1x128xf32>
    %64 = arith.mulf %63, %63 : vector<1x128xf32>
    %65 = arith.mulf %64, %31 : vector<1x128xf32>
    %66 = vector.extract_strided_slice %52 {offsets = [1, 0], sizes = [1, 128], strides = [1, 1]} : vector<2x128xf32> to vector<1x128xf32>
    %cst_13 = arith.constant 4.000000e+00 : f32
    %67 = vector.broadcast %cst_13 : f32 to vector<1x128xf32>
    %68 = arith.subf %66, %67 : vector<1x128xf32>
    %69 = arith.mulf %68, %68 : vector<1x128xf32>
    %70 = arith.mulf %69, %32 : vector<1x128xf32>
    %71 = vector.extract_strided_slice %5 {offsets = [0, 0], sizes = [1, 128], strides = [1, 1]} : vector<6x128xf32> to vector<1x128xf32>
    %72 = vector.extract_strided_slice %5 {offsets = [1, 0], sizes = [1, 128], strides = [1, 1]} : vector<6x128xf32> to vector<1x128xf32>
    %73 = arith.addf %71, %72 : vector<1x128xf32>
    %cst_14 = arith.constant 5.000000e-01 : f32
    %74 = vector.broadcast %cst_14 : f32 to vector<1x128xf32>
    %75 = arith.mulf %73, %74 : vector<1x128xf32>
    %cst_15 = arith.constant 5.000000e-01 : f32
    %76 = vector.broadcast %cst_15 : f32 to vector<1x128xf32>
    %77 = arith.subf %75, %76 : vector<1x128xf32>
    %78 = arith.mulf %77, %77 : vector<1x128xf32>
    %79 = arith.mulf %78, %31 : vector<1x128xf32>
    %80 = vector.extract_strided_slice %4 {offsets = [3, 0], sizes = [1, 128], strides = [1, 1]} : vector<6x128xf32> to vector<1x128xf32>
    %cst_16 = arith.constant 3.000000e-01 : f32
    %81 = vector.broadcast %cst_16 : f32 to vector<1x128xf32>
    %82 = arith.subf %81, %80 : vector<1x128xf32>
    %cst_17 = arith.constant 0.000000e+00 : f32
    %83 = vector.broadcast %cst_17 : f32 to vector<1x128xf32>
    %84 = arith.maximumf %82, %83 : vector<1x128xf32>
    %85 = arith.mulf %84, %84 : vector<1x128xf32>
    %86 = arith.mulf %85, %32 : vector<1x128xf32>
    %87 = vector.extract_strided_slice %5 {offsets = [4, 0], sizes = [1, 128], strides = [1, 1]} : vector<6x128xf32> to vector<1x128xf32>
    %88 = vector.extract_strided_slice %5 {offsets = [5, 0], sizes = [1, 128], strides = [1, 1]} : vector<6x128xf32> to vector<1x128xf32>
    %89 = arith.addf %87, %88 : vector<1x128xf32>
    %cst_18 = arith.constant 5.000000e-01 : f32
    %90 = vector.broadcast %cst_18 : f32 to vector<1x128xf32>
    %91 = arith.mulf %89, %90 : vector<1x128xf32>
    %cst_19 = arith.constant 6.000000e-01 : f32
    %92 = vector.broadcast %cst_19 : f32 to vector<1x128xf32>
    %93 = arith.subf %91, %92 : vector<1x128xf32>
    %94 = arith.mulf %93, %93 : vector<1x128xf32>
    %95 = arith.mulf %94, %33 : vector<1x128xf32>
    %cst_20 = arith.constant 0.000000e+00 : f32
    %96 = vector.broadcast %cst_20 : f32 to vector<1x128xf32>
    %97 = tpu.concatenate %57, %60, %65, %70, %79, %86, %95, %96 in 0 : vector<1x128xf32>, vector<1x128xf32>, vector<1x128xf32>, vector<1x128xf32>, vector<1x128xf32>, vector<1x128xf32>, vector<1x128xf32>, vector<1x128xf32> -> vector<8x128xf32>
    %c16 = arith.constant 16 : index
    %c0_21 = arith.constant 0 : index
    %98 = vector.load %arg4[%c16, %c0_21] : memref<24x1xf32, #tpu.memory_space<vmem>>, vector<8x1xf32>
    %cst_22 = arith.constant dense<0.000000e+00> : vector<8xf32>
    %99 = vector.multi_reduction <add>, %97, %cst_22 [1] : vector<8x128xf32> to vector<8xf32>
    %100 = vector.shape_cast %99 : vector<8xf32> to vector<8x1xf32>
    %101 = arith.addf %98, %100 : vector<8x1xf32>
    %c16_23 = arith.constant 16 : index
    %c0_24 = arith.constant 0 : index
    %102 = vector.load %arg4[%c16_23, %c0_24] : memref<24x1xf32, #tpu.memory_space<vmem>>, vector<8x1xf32>
    tpu.vector_store %arg4[%c16_23, %c0_24], %101 {strides = array<i32>} : memref<24x1xf32, #tpu.memory_space<vmem>>, vector<8x1xf32>,
    %c0_i32_25 = arith.constant 0 : i32
    %103 = arith.cmpi eq, %arg1, %c0_i32_25 : i32
    %104 = arith.extui %103 : i1 to i32
    %c0_i32_26 = arith.constant 0 : i32
    %105 = arith.cmpi ne, %104, %c0_i32_26 : i32
    scf.if %105 {
      %c0_27 = arith.constant 0 : index
      %c0_28 = arith.constant 0 : index
      %106 = vector.load %arg4[%c0_27, %c0_28] : memref<24x1xf32, #tpu.memory_space<vmem>>, vector<24x1xf32>
      %107 = vector.shape_cast %106 : vector<24x1xf32> to vector<1x24x1xf32>
      %108 = vector.shape_cast %107 : vector<1x24x1xf32> to vector<1x24x1xf32>
      %109 = vector.broadcast %108 : vector<1x24x1xf32> to vector<1x24x128xf32>
      %c0_29 = arith.constant 0 : index
      %c0_30 = arith.constant 0 : index
      %c0_31 = arith.constant 0 : index
      %110 = vector.load %arg3[%c0_29, %c0_30, %c0_31] : memref<1x24x128xf32, #tpu.memory_space<vmem>>, vector<1x24x128xf32>
      tpu.vector_store %arg3[%c0_29, %c0_30, %c0_31], %109 {strides = array<i32>} : memref<1x24x128xf32, #tpu.memory_space<vmem>>, vector<1x24x128xf32>,
    } else {
    }
    return
  }
  func.func @transform_0(%arg0: i32, %arg1: i32) -> (i32, i32) {
    %c1_i32 = arith.constant 1 : i32
    %0 = arith.muli %arg0, %c1_i32 : i32
    %1 = arith.addi %0, %arg1 : i32
    %c0_i32 = arith.constant 0 : i32
    %c0_i32_0 = arith.constant 0 : i32
    return %c0_i32, %1 : i32, i32
  }
  func.func @transform_1(%arg0: i32, %arg1: i32) -> (i32, i32, i32) {
    %c0_i32 = arith.constant 0 : i32
    %c0_i32_0 = arith.constant 0 : i32
    %c0_i32_1 = arith.constant 0 : i32
    return %arg0, %c0_i32, %c0_i32_0 : i32, i32, i32
  }
}

</mosaic_0001>

<llo_original>
// kernel: tpu_custom_call.1
$region0: #{tpu_custom_call.1}
  #allocation0 [shape = 'u32[]', space=smem, size = 0x4, offset = 0x4, fixed_abs, tag = 'smem constant byte address 0x4 - core index']
  #allocation1 [shape = 'u32[72,128]{1,0:T(1,128)}', space=vmem, size = 0x9000, scoped, tag = 'internal scratch']
  #allocation2 [shape = 'f32[24,1]{1,0:T(8,128)}', space=vmem, size = 0x3000, scoped, tag = 'scratch operand']
  %s0 = inlined_call_operand.hbm [shape: f32[24,128], index: 0, kind: input, shape index: {}]
  %s1 = inlined_call_operand.hbm [shape: f32[1,24,128], index: 1, kind: output, shape index: {}]
  %s2 = sld [smem:[#allocation0]]
  $region26: #{tpu_custom_call.1} parent=0
    _
  %s4 = ssub.s32 1, %s2
  %s5 = scalar_select 0, %s4, %s2
  $region1: #{tpu_custom_call.1} parent=0
    #allocation3 [shape = 'u8[12288]{0}', space=vmem, size = 0x3000, scoped, tag = 'input window, operand 0, single buffered']
    #allocation4 [shape = 's32[1]{0}', space=sflag, size = 0x4, scoped, tag = 'scoped memory for tpu_custom_call.1']
    #allocation5 [shape = 's32[1]{0}', space=sflag, size = 0x4, scoped, tag = 'scoped memory for tpu_custom_call.1']
    #allocation6 [shape = 'u8[12288]{0}', space=vmem, size = 0x3000, scoped, tag = 'output window, operand 0, single buffered']
    %6 = vsyncpa [#allocation4], 0
    %7 = vsyncpa [#allocation5], 0
    // Predicated region
    $region2: #{tpu_custom_call.1} parent=1 // pred_check
      _
    $region3: #{tpu_custom_call.1} parent=1 // pred_check_branch
      %9 = sbr.rel (0) target = $region5
    $region4: #{tpu_custom_call.1} parent=1 // pred_region
      %s10 = sadd.s32 0, 0
      %12 = vsyncadd [#allocation4], 0
      %s13 = smul.addr %s10, 8
      %s14 = scalar_lea.hbm %s0, %s13
      %s15 = sshll.u32 %s14, 4
      %s16 = int_to_ptr.hbm [resolvable:$true] %s15
      %s17 = sshll.u32 [#allocation3], 4
      %s18 = int_to_ptr.vmem [resolvable:$true] %s17
      %23 = dma.hbm_to_vmem [thread:$0]  %s16, 384, %s18, [#allocation4], 128, 128, 8
    $region5: #{tpu_custom_call.1} parent=1 // pred_fallthru
      _
    // Predicated region
    $region6: #{tpu_custom_call.1} parent=1 // pred_check
      _
    $region7: #{tpu_custom_call.1} parent=1 // pred_check_branch
      %25 = sbr.rel (0) target = $region9
    $region8: #{tpu_custom_call.1} parent=1 // pred_region
      %27 = dma.done [#allocation4], 384
    $region9: #{tpu_custom_call.1} parent=1 // pred_fallthru
      _
    %s28 = sadd.s32 0, 0
    %p29 = scmp.eq.s32.totalorder 0, 0
    // Predicated region
    $region10: #{tpu_custom_call.1} parent=1 // pred_check
      %p30 = pneg %p29
    $region11: #{tpu_custom_call.1} parent=1 // pred_check_branch
      %32 = sbr.rel (%p30) target = $region13
    $region12: #{tpu_custom_call.1} parent=1 // pred_region
      %vm33 = vcmask 7168
      %34 = vst.msk [vmem:[#allocation2] sm:$0xff] %vm33, 0.0
      %35 = vst.msk [vmem:[#allocation2 + $0x8] sm:$0xff] %vm33, 0.0
      %36 = vst.msk [vmem:[#allocation2 + $0x10] sm:$0xff] %vm33, 0.0
    $region13: #{tpu_custom_call.1} parent=1 // pred_fallthru
      _
    %v37 = vld [vmem:[#allocation3] sm:$0xff]
    %v38 = vld [vmem:[#allocation3 + $0x8] sm:$0xff]
    %v39 = vld [vmem:[#allocation3 + $0x10] sm:$0xff]
    %v40 = vand.u32 2147483647, %v38
    %v41 = vand.u32 2147483647, %v39
    %v43 = vrot.slane %v41, 6
    %v45 = vadd.f32 %v40, %v43
    %v46 = vadd.f32 %v41, %v43
    %vm47 = vcmp.gt.f32.partialorder %v45, 0.0
    %vm48 = vcmp.gt.f32.partialorder %v46, 0.0
    %v49 = vsel %vm47, 1, 0
    %v50 = vsel %vm48, 1, 0
    %v51 = vcvt.s32.f32 %v49
    %v52 = vcvt.s32.f32 %v50
    %vm55 = vcmask 1043456
    %v56 = vrot.slane %v38, 4
    %v57 = vrot.slane %v39, 4
    %v58 = vsel %vm55, %v56, %v57
    %v60 = vsub.f32 %v37, %v58
    %v61 = vmul.f32 %v60, %v60
    %v63 = vsub.f32 %v37, %v57
    %v64 = vsub.f32 %v38, %v57
    %v65 = vmul.f32 %v63, %v63
    %v66 = vmul.f32 %v64, %v64
    %vm69 = vcmask 1041408
    %v70 = vrot.slane %v65, 6
    %v71 = vrot.slane %v66, 6
    %v72 = vsel %vm69, %v70, %v71
    %v74 = vadd.f32 %v61, %v72
    %v75 = vld [vmem:[#allocation2] sm:$0x3f]
    %v78 = vrot.slane %v51, 4
    %v79 = vrot.slane %v52, 4
    %v80 = vsel %vm55, %v78, %v79
    %v82 = vmul.f32 %v74, %v80
    %vm83 = vcmask 1045504
    %v84 = vsel %vm83, %v82, 0.0
    %85 = vadd.xlane.f32.xlu0 %v84
    %v86 = vpop.xlane.xlu0 %85
    %v87 = vadd.f32 %v75, %v86
    %vm88 = vcmask 5120
    %89 = vst.msk [vmem:[#allocation2] sm:$0x3f] %vm88, %v87
    %v90 = vld [vmem:[#allocation2 + $0x8] sm:$0x3f]
    %vm91 = vcmask 1047556
    %v92 = vsel %vm91, %v51, 0.0
    %93 = vadd.xlane.f32.xlu0 %v92
    %v94 = vpop.xlane.xlu0 %93
    %v95 = vsel %vm69, %v52, 0.0
    %96 = vadd.xlane.f32.xlu0 %v95
    %v97 = vpop.xlane.xlu0 %96
    %v100 = vrot.slane %v94, 4
    %v101 = vrot.slane %v97, 4
    %v102 = vsel %vm55, %v100, %v101
    %v104 = vadd.f32 %v90, %v102
    %105 = vst.msk [vmem:[#allocation2 + $0x8] sm:$0x3f] %vm88, %v104
    %v107 = vrot.slane %v37, 7
    %v109 = vsub.f32 %v37, %v107
    %v111 = vrot.slane %v109, 1
    %v113 = vrot.slane %v109, 2
    %vm115 = vcmask 1040384
    %v116 = vsel %vm115, %v111, %v113
    %v117 = vrot.slane %v38, 7
    %v119 = vsub.f32 %v38, %v117
    %v120 = vrot.slane %v109, 7
    %v122 = vsel %vm115, %v120, %v119
    %v123 = vand.u32 2147483647, %v116
    %v124 = vand.u32 2147483647, %v122
    %v125 = vmin.f32 %v123, %v124
    %v126 = vmax.f32 %v123, %v124
    %v127 = vrcp.pop %v126
    %v128 = vmul.f32 %v126, %v127
    %v129 = vsub.f32 1.0, %v128
    %v130 = vmul.f32 %v127, %v129
    %v131 = vadd.f32 %v127, %v130
    %vm132 = vweird.f32 %v126
    %vm133 = vweird.f32 %v127
    %vm134 = vmor %vm132, %vm133
    %v135 = vsel %vm134, %v127, %v131
    %v136 = vand.u32 2147483647, %v126
    %vm137 = vcmp.eq.f32.partialorder %v136, 8.507059e+37
    %v138 = vand.u32 %v126, 2147483648
    %v139 = vor.u32 1.1754944e-38, %v138
    %v140 = vsel %vm137, %v139, %v135
    %v141 = vmul.f32 %v125, %v140
    %v142 = vmul.f32 %v141, %v141
    %v143 = vmul.f32 0.002785687, %v142
    %v144 = vadd.f32 %v143, -0.015866
    %v145 = vmul.f32 %v144, %v142
    %v146 = vadd.f32 %v145, 0.04247222
    %v147 = vmul.f32 %v146, %v142
    %v148 = vadd.f32 %v147, -0.074975304
    %v149 = vmul.f32 %v148, %v142
    %v150 = vadd.f32 %v149, 0.1064488
    %v151 = vmul.f32 %v150, %v142
    %v152 = vadd.f32 %v151, -0.14207031
    %v153 = vmul.f32 %v152, %v142
    %v154 = vadd.f32 %v153, 0.19993454
    %v155 = vmul.f32 %v154, %v142
    %v156 = vadd.f32 %v155, -0.33333147
    %v157 = vmul.f32 %v156, %v142
    %v158 = vmul.f32 %v157, %v141
    %v159 = vadd.f32 %v158, %v141
    %vm160 = vcmp.gt.f32.partialorder %v124, %v123
    %v161 = vsub.f32 1.5707964, %v159
    %v162 = vsel %vm160, %v161, %v159
    %vm163 = vcmp.lt.f32.partialorder %v116, 0.0
    %v164 = vsub.f32 3.1415927, %v162
    %v165 = vsel %vm163, %v164, %v162
    %vm166 = vcmp.lt.s32.totalorder %v116, 0
    %v167 = vsel %vm166, 3.1415927, 0.0
    %vm168 = vcmp.eq.f32.partialorder %v122, 0.0
    %v169 = vsel %vm168, %v167, %v165
    %vm170 = vcmp.ne.f32.partialorder %v116, %v116
    %vm171 = vcmp.ne.f32.partialorder %v122, %v122
    %vm172 = vmor %vm170, %vm171
    %v173 = vsel %vm172, nan, %v169
    %vm174 = vcmp.lt.f32.partialorder %v116, 0.0
    %v175 = vsel %vm174, 2.3561945, 0.7853982
    %vm176 = vcmp.eq.s32.totalorder %v123, inf
    %vm177 = vcmp.eq.s32.totalorder %v124, inf
    %vm178 = vmand %vm176, %vm177
    %v179 = vsel %vm178, %v175, %v173
    %v180 = vand.u32 2147483647, %v179
    %v181 = vand.u32 %v122, 2147483648
    %v182 = vor.u32 %v180, %v181
    %v183 = vmul.f32 %v116, %v116
    %v184 = vmul.f32 %v122, %v122
    %v185 = vadd.f32 %v183, %v184
    %v186 = vrsqrt.pop %v185
    %v187 = vmul.f32 %v186, %v185
    %v188 = vmul.f32 %v187, %v186
    %v189 = vmul.f32 0.5, %v188
    %v190 = vsub.f32 1.5, %v189
    %v191 = vmul.f32 %v186, %v190
    %v192 = vmul.f32 %v185, %v191
    %vm193 = vcmp.eq.f32.partialorder %v185, inf
    %v194 = vsel %vm193, %v185, %v192
    %vm195 = vcmp.eq.f32.partialorder %v185, 0.0
    %v196 = vand.u32 %v185, 2147483648
    %v197 = vsel %vm195, %v196, %v194
    %v198 = vsub.f32 %v182, 0.1
    %v199 = vmul.f32 %v198, %v198
    %v201 = vmul.f32 %v199, %v78
    %v202 = vmul.f32 %v182, %v182
    %v203 = vmul.f32 %v202, %v78
    %v204 = vsub.f32 %v197, 5.0
    %v205 = vmul.f32 %v204, %v204
    %v206 = vmul.f32 %v205, %v78
    %v207 = vsub.f32 %v197, 4.0
    %v208 = vmul.f32 %v207, %v207
    %v209 = vmul.f32 %v208, %v78
    %v210 = vrot.slane %v37, 1
    %v212 = vadd.f32 %v37, %v210
    %v213 = vmul.f32 %v212, 0.5
    %v214 = vsub.f32 %v213, 0.5
    %v215 = vmul.f32 %v214, %v214
    %v216 = vrot.slane %v51, 6
    %v218 = vmul.f32 %v215, %v216
    %v219 = vsub.f32 0.3, %v37
    %v220 = vmax.f32 %v219, 0.0
    %v221 = vmul.f32 %v220, %v220
    %v222 = vrot.slane %v51, 2
    %v224 = vmul.f32 %v221, %v222
    %v225 = vrot.slane %v38, 1
    %v227 = vadd.f32 %v38, %v225
    %v228 = vmul.f32 %v227, 0.5
    %v229 = vsub.f32 %v228, 0.6
    %v230 = vmul.f32 %v229, %v229
    %v231 = vmul.f32 %v230, %v78
    %v233 = vrot.slane %v206, 6
    %v236 = vrot.slane %v209, 6
    %v239 = vrot.slane %v218, 2
    %v242 = vrot.slane %v224, 6
    %v245 = vrot.slane %v231, 4
    %v247 = vsel %vm115, %v201, %v203
    %v248 = vsel %vm69, %v247, %v233
    %vm249 = vcmask 1042432
    %v250 = vsel %vm249, %v248, %v236
    %v251 = vsel %vm55, %v250, %v239
    %vm252 = vcmask 1044480
    %v253 = vsel %vm252, %v251, %v242
    %v254 = vsel %vm83, %v253, %v245
    %vm255 = vcmask 1046528
    %v256 = vsel %vm255, %v254, 0.0
    %v257 = vld [vmem:[#allocation2 + $0x10] sm:$0xff]
    %258 = vadd.xlane.f32.xlu0 %v256
    %v259 = vpop.xlane.xlu0 %258
    %v260 = vadd.f32 %v257, %v259
    %vm261 = vcmask 7168
    %262 = vst.msk [vmem:[#allocation2 + $0x10] sm:$0xff] %vm261, %v260
    // Predicated region
    $region14: #{tpu_custom_call.1} parent=1 // pred_check
      %p263 = pneg %p29
    $region15: #{tpu_custom_call.1} parent=1 // pred_check_branch
      %265 = sbr.rel (%p263) target = $region17
    $region16: #{tpu_custom_call.1} parent=1 // pred_region
      %v266 = vld [vmem:[#allocation2] sm:$0xff]
      %v267 = vld [vmem:[#allocation2 + $0x8] sm:$0xff]
      %v268 = vld [vmem:[#allocation2 + $0x10] sm:$0xff]
      %270 = vset.pattern.permute.xlu0 0
      %271 = vperm.xlu0 %270, %v266
      %v272 = vpop.permute.xlu0 %271
      %275 = vset.pattern.permute.xlu0 0
      %276 = vperm.xlu0 %275, %v267
      %v277 = vpop.permute.xlu0 %276
      %280 = vset.pattern.permute.xlu0 0
      %281 = vperm.xlu0 %280, %v268
      %v282 = vpop.permute.xlu0 %281
      %284 = vst [vmem:[#allocation6] sm:$0xff] %v272
      %285 = vst [vmem:[#allocation6 + $0x8] sm:$0xff] %v277
      %286 = vst [vmem:[#allocation6 + $0x10] sm:$0xff] %v282
    $region17: #{tpu_custom_call.1} parent=1 // pred_fallthru
      _
    // Predicated region
    $region18: #{tpu_custom_call.1} parent=1 // pred_check
      _
    $region19: #{tpu_custom_call.1} parent=1 // pred_check_branch
      %288 = sbr.rel (0) target = $region21
    $region20: #{tpu_custom_call.1} parent=1 // pred_region
      %290 = vsyncadd [#allocation5], 0
      %s291 = sshll.u32 [#allocation6], 4
      %s292 = int_to_ptr.vmem [resolvable:$true] %s291
      %s293 = sshll.u32 %s1, 4
      %s294 = int_to_ptr.hbm [resolvable:$true] %s293
      %299 = dma.vmem_to_hbm [thread:$0]  %s292, 384, %s294, [#allocation5], 128, 128, 8
    $region21: #{tpu_custom_call.1} parent=1 // pred_fallthru
      _
    // Predicated region
    $region22: #{tpu_custom_call.1} parent=1 // pred_check
      _
    $region23: #{tpu_custom_call.1} parent=1 // pred_check_branch
      %301 = sbr.rel (0) target = $region25
    $region24: #{tpu_custom_call.1} parent=1 // pred_region
      %303 = dma.done [#allocation5], 384
    $region25: #{tpu_custom_call.1} parent=1 // pred_fallthru
      _
    %304 = vsyncpa [#allocation4], 1
    %305 = vsyncpa [#allocation5], 1

</llo_original>
